<compile_context>
chip_gen: v5e
topology: v5e:2x2
jax: 0.10.0
libtpu: 0.0.40
codegen_flags: <defaults>
</compile_context>

<pallas_src>
import functools

import jax
import jax.numpy as jnp
from jax.experimental import pallas as pl
from jax.experimental.pallas import tpu as pltpu


def _round_up(a, b):
    return ((a + b - 1) // b) * b


def _chip_config():
    """Generation-aware VMEM limit and element-wise ('slab') compute dtype."""
    kind = ""
    try:
        kind = jax.devices()[0].device_kind.lower()
    except Exception:
        pass
    if "v5 lite" in kind or "v5lite" in kind or "v5e" in kind:
        # 128 MiB VMEM, but no bf16 VPU datapath -> keep the slab math in f32.
        return {"vmem_limit": 96 * 1024 * 1024, "slab_dtype": jnp.float32}
    if "v6" in kind:
        # 128 MiB VMEM, bf16-native VPU.
        return {"vmem_limit": 96 * 1024 * 1024, "slab_dtype": jnp.bfloat16}
    if "v7" in kind:
        # 64 MiB physical VMEM per TensorCore, bf16-native VPU.
        return {"vmem_limit": 48 * 1024 * 1024, "slab_dtype": jnp.bfloat16}
    # Unknown / older generation: conservative limit, f32 element-wise datapath.
    return {"vmem_limit": 64 * 1024 * 1024, "slab_dtype": jnp.float32}


def _pick_key_tile(hd, ti, cfg):
    """Largest key tile (multiple of 128, <= 512) whose pairwise slabs fit the VMEM budget."""
    itemsize = 2 if cfg["slab_dtype"] == jnp.bfloat16 else 4
    budget = cfg["vmem_limit"] // 3            # headroom for a 3rd live slab copy + blocks
    tj = budget // (hd * ti * itemsize * 2)    # 2 live (TI, TJ, HD) slabs inside the budget
    tj = (tj // 128) * 128
    return int(max(128, min(512, tj)))


# --------------------------- projection kernel (g = x @ W) ---------------------------
def _proj_kernel(x_ref, w_ref, g_ref):
    g_ref[...] = jnp.dot(
        x_ref[...].astype(jnp.bfloat16), w_ref[...].astype(jnp.bfloat16),
        preferred_element_type=jnp.float32).astype(g_ref.dtype)


def linear_project(x, w, cfg):
    """g = x @ w with bf16 MXU operands, f32 accumulation, bf16 output."""
    n, f_in = x.shape
    hd = w.shape[1]
    tm = 256 if n % 256 == 0 else 128
    return pl.pallas_call(
        _proj_kernel,
        out_shape=jax.ShapeDtypeStruct((n, hd), jnp.bfloat16),
        grid=(n // tm,),
        in_specs=[
            pl.BlockSpec((tm, f_in), lambda i: (i, 0)),
            pl.BlockSpec((f_in, hd), lambda i: (0, 0)),   # constant-index weight block (tiny)
        ],
        out_specs=pl.BlockSpec((tm, hd), lambda i: (i, 0)),
        compiler_params=pltpu.CompilerParams(
            dimension_semantics=("parallel",),
            vmem_limit_bytes=cfg["vmem_limit"]),
        cost_estimate=pl.CostEstimate(
            flops=int(2 * n * f_in * hd), transcendentals=0,
            bytes_accessed=int(4 * n * f_in + 4 * f_in * hd + 2 * n * hd)),
    )(x, w)


# ------------------- dense-head attention kernel (layer 1, H*D = 128) -------------------
def _attn_dense_kernel(gq_ref, gk_ref, attn_ref, bias_ref, out_ref,
                       m_ref, l_ref, acc_ref, *,
                       n_heads, d_head, slope, apply_elu, out_pad, slab_dtype):
    ti = gq_ref.shape[0]
    j = pl.program_id(1)

    @pl.when(j == 0)
    def _():
        m_ref[...] = jnp.full(m_ref.shape, -jnp.inf, m_ref.dtype)
        l_ref[...] = jnp.zeros(l_ref.shape, l_ref.dtype)
        acc_ref[...] = jnp.zeros(acc_ref.shape, acc_ref.dtype)

    g_v = gk_ref[...]                                 # (TJ, HD) bf16 -- MXU values
    g_q = gq_ref[...].astype(slab_dtype)              # (TI, HD)
    g_k = g_v.astype(slab_dtype)                      # (TJ, HD)
    attn_t = attn_ref[...].astype(slab_dtype)         # (1, 1, HD) attn vector tiled over heads
    bias = bias_ref[...].astype(jnp.float32)          # (TI, TJ) additive mask (0 / -1e30)

    # Pairwise slab batched over all heads (HD lane-dense) + a single full-lane attn multiply.
    s = g_q[:, None, :] + g_k[None, :, :]             # (TI, TJ, HD)
    w = jnp.maximum(s, slope * s) * attn_t            # LeakyReLU(0.2) fused into the max

    for h in range(n_heads):                          # static unroll (H = 4)
        sl = slice(h * d_head, (h + 1) * d_head)
        e = jnp.sum(w[:, :, sl], axis=-1).astype(jnp.float32) + bias      # (TI, TJ) logits
        m_prev = m_ref[h]                                                 # (TI, 1)
        m_new = jnp.maximum(m_prev, jnp.max(e, axis=-1, keepdims=True))
        alpha = jnp.exp(m_prev - m_new)
        p = jnp.exp(e - m_new)
        l_ref[h] = alpha * l_ref[h] + jnp.sum(p, axis=-1, keepdims=True)
        acc_ref[h] = alpha * acc_ref[h] + jnp.dot(
            p.astype(jnp.bfloat16), g_v[:, sl], preferred_element_type=jnp.float32)
        m_ref[h] = m_new

    @pl.when(j == pl.num_programs(1) - 1)
    def _():
        o = jnp.zeros((ti, d_head), jnp.float32)
        for h in range(n_heads):                      # head mean (is_concat=False), 1/H folded in
            inv = pl.reciprocal(l_ref[h] * float(n_heads), approx=True)
            o = o + acc_ref[h] * inv
        if apply_elu:                                 # fused nn.ELU() epilogue (layer 1)
            o = jnp.where(o > 0, o, jnp.exp(o) - 1.0)
        if out_pad > d_head:                          # lane-dense 128-wide unmasked store
            o = jnp.concatenate(
                [o, jnp.zeros((ti, out_pad - d_head), jnp.float32)], axis=-1)
        out_ref[...] = o.astype(out_ref.dtype)


def gat_attention_dense(g, attn_tiled, bias, *, n_heads, d_head, apply_elu,
                        ti, tj, cfg, out_dtype):
    n_pad, hd = g.shape
    assert hd == n_heads * d_head
    out_pad = _round_up(max(d_head, 128), 128)
    kernel = functools.partial(
        _attn_dense_kernel, n_heads=n_heads, d_head=d_head, slope=0.2,
        apply_elu=apply_elu, out_pad=out_pad, slab_dtype=cfg["slab_dtype"])
    return pl.pallas_call(
        kernel,
        out_shape=jax.ShapeDtypeStruct((n_pad, out_pad), out_dtype),
        grid=(n_pad // ti, n_pad // tj),
        in_specs=[
            pl.BlockSpec((ti, hd), lambda i, j: (i, 0)),       # query rows (bf16)
            pl.BlockSpec((tj, hd), lambda i, j: (j, 0)),       # key/value rows (bf16)
            pl.BlockSpec((1, 1, hd), lambda i, j: (0, 0, 0)),  # attn vector, tiled over heads
            pl.BlockSpec((ti, tj), lambda i, j: (i, j)),       # additive mask tile (bf16)
        ],
        out_specs=pl.BlockSpec((ti, out_pad), lambda i, j: (i, 0)),
        scratch_shapes=[
            pltpu.VMEM((n_heads, ti, 1), jnp.float32),         # running max
            pltpu.VMEM((n_heads, ti, 1), jnp.float32),         # running denominator
            pltpu.VMEM((n_heads, ti, d_head), jnp.float32),    # running numerator
        ],
        compiler_params=pltpu.CompilerParams(
            dimension_semantics=("parallel", "arbitrary"),
            vmem_limit_bytes=cfg["vmem_limit"]),
        cost_estimate=pl.CostEstimate(
            flops=int(7 * n_pad * n_pad * hd),
            transcendentals=int(n_pad * n_pad * n_heads),
            bytes_accessed=int(2 * n_pad * n_pad
                               + 2 * (n_pad // ti) * n_pad * hd * 2
                               + n_pad * hd * 2 + n_pad * out_pad * 2)),
    )(g, g, attn_tiled, bias)


# --------------- small-head attention kernel (output layer, 1 head, D = 8) ---------------
def _attn_small_kernel(attn_ref, q_ref, kT_ref, v_ref, bias_ref, out_ref,
                       m_ref, l_ref, acc_ref, *,
                       d_head, slope, apply_elu, out_pad, slab_dtype):
    ti = q_ref.shape[0]
    j = pl.program_id(1)

    @pl.when(j == 0)
    def _():
        m_ref[...] = jnp.full(m_ref.shape, -jnp.inf, m_ref.dtype)
        l_ref[...] = jnp.zeros(l_ref.shape, l_ref.dtype)
        acc_ref[...] = jnp.zeros(acc_ref.shape, acc_ref.dtype)

    q = q_ref[...].astype(slab_dtype)                 # (TI, D)
    kT = kT_ref[...].astype(slab_dtype)               # (D, TJ) pre-transposed keys
    v = v_ref[...]                                    # (TJ, D) bf16 -- MXU values
    e = bias_ref[...].astype(jnp.float32)             # (TI, TJ) additive mask (0 / -1e30)

    # Per-feature pairwise planes: keeps the key axis on the 128 lanes (lane-dense) instead
    # of an 8/128-lane-utilized (TI, TJ, D) slab; attn scalars come from SMEM.
    for d in range(d_head):                           # static unroll (D = n_classes = 8)
        s_d = q[:, d:d + 1] + kT[d:d + 1, :]          # (TI, 1) + (1, TJ) -> (TI, TJ)
        e = e + attn_ref[d] * jnp.maximum(s_d, slope * s_d).astype(jnp.float32)

    m_prev = m_ref[...]
    m_new = jnp.maximum(m_prev, jnp.max(e, axis=-1, keepdims=True))
    alpha = jnp.exp(m_prev - m_new)
    p = jnp.exp(e - m_new)
    l_ref[...] = alpha * l_ref[...] + jnp.sum(p, axis=-1, keepdims=True)
    acc_ref[...] = alpha * acc_ref[...] + jnp.dot(
        p.astype(jnp.bfloat16), v, preferred_element_type=jnp.float32)
    m_ref[...] = m_new

    @pl.when(j == pl.num_programs(1) - 1)
    def _():
        o = acc_ref[...] * pl.reciprocal(l_ref[...], approx=True)
        if apply_elu:
            o = jnp.where(o > 0, o, jnp.exp(o) - 1.0)
        if out_pad > d_head:
            o = jnp.concatenate(
                [o, jnp.zeros((ti, out_pad - d_head), jnp.float32)], axis=-1)
        out_ref[...] = o.astype(out_ref.dtype)


def gat_attention_small(g, g_t, attn_vec, bias, *, d_head, apply_elu,
                        ti, tj, cfg, out_dtype):
    """Single-head GATv2 attention for a small head dim (the output layer)."""
    n_pad, d = g.shape
    assert d == d_head
    out_pad = _round_up(max(d_head, 128), 128)
    kernel = functools.partial(
        _attn_small_kernel, d_head=d_head, slope=0.2, apply_elu=apply_elu,
        out_pad=out_pad, slab_dtype=cfg["slab_dtype"])
    return pl.pallas_call(
        kernel,
        out_shape=jax.ShapeDtypeStruct((n_pad, out_pad), out_dtype),
        grid=(n_pad // ti, n_pad // tj),
        in_specs=[
            pl.BlockSpec(memory_space=pltpu.MemorySpace.SMEM),   # attn vector (D,) scalars
            pl.BlockSpec((ti, d_head), lambda i, j: (i, 0)),     # query rows (bf16)
            pl.BlockSpec((d_head, tj), lambda i, j: (0, j)),     # keys, pre-transposed (bf16)
            pl.BlockSpec((tj, d_head), lambda i, j: (j, 0)),     # values (bf16)
            pl.BlockSpec((ti, tj), lambda i, j: (i, j)),         # additive mask tile (bf16)
        ],
        out_specs=pl.BlockSpec((ti, out_pad), lambda i, j: (i, 0)),
        scratch_shapes=[
            pltpu.VMEM((ti, 1), jnp.float32),
            pltpu.VMEM((ti, 1), jnp.float32),
            pltpu.VMEM((ti, d_head), jnp.float32),
        ],
        compiler_params=pltpu.CompilerParams(
            dimension_semantics=("parallel", "arbitrary"),
            vmem_limit_bytes=cfg["vmem_limit"]),
        cost_estimate=pl.CostEstimate(
            flops=int(7 * n_pad * n_pad * d_head),
            transcendentals=int(n_pad * n_pad),
            bytes_accessed=int(2 * n_pad * n_pad
                               + 2 * (n_pad // ti) * n_pad * d_head * 2
                               + n_pad * out_pad * 4)),
    )(attn_vec, g, g_t, g, bias)


# --------------------------------- full forward pass ---------------------------------
def gat_forward(params, x, adj_mat):
    """GAT.forward (eval mode: dropouts are identity)."""
    n, _ = x.shape
    n_heads = params["n_heads"]
    n_hidden = params["n_hidden"]
    n_classes = params["n_classes"]
    hd1 = n_heads * n_hidden

    cfg = _chip_config()
    ti = 128                                # row tile: keeps MXU M >= 128 and gives real graph
                                            # sizes a multi-tile "parallel" axis (v7x megacore).
    tj = _pick_key_tile(hd1, ti, cfg)       # key tile from the VMEM slab budget
    tj = min(tj, _round_up(n, 128))
    n_pad = _round_up(n, tj)                # tj is a multiple of 128 -> ti divides n_pad too

    # Pad node features once; build the additive -1e30 edge-mask once (bf16, reused by both
    # layers; padded key columns are fully masked).
    x_p = jnp.pad(x, ((0, n_pad - n), (0, 0)))
    adj = adj_mat[..., 0] != 0
    bias = jnp.where(adj, 0.0, -1e30).astype(jnp.bfloat16)
    bias = jnp.pad(bias, ((0, n_pad - n), (0, n_pad - n)), constant_values=-1e30)

    # ---- layer 1: n_heads heads, head mean (is_concat=False), fused ELU ----
    g1 = linear_project(x_p, params["w1"], cfg)                          # (n_pad, H*D) bf16
    attn1 = jnp.tile(params["attn1"].astype(jnp.float32), n_heads).reshape(1, 1, hd1)
    h1 = gat_attention_dense(g1, attn1, bias, n_heads=n_heads, d_head=n_hidden,
                             apply_elu=True, ti=ti, tj=tj, cfg=cfg,
                             out_dtype=jnp.bfloat16)                     # (n_pad, 128) bf16

    # ---- output layer: single head, small head dim ----
    # h1 is stored 128-wide (zero padded); pad w2's rows to match instead of slicing h1.
    w2 = params["w2"].astype(jnp.float32)
    w2_p = jnp.zeros((h1.shape[1], n_classes), jnp.float32).at[:n_hidden].set(w2)
    g2 = linear_project(h1, w2_p, cfg)                                   # (n_pad, C) bf16
    g2_t = g2.T                                                          # (C, n_pad) bf16
    out = gat_attention_small(g2, g2_t, params["attn2"].astype(jnp.float32), bias,
                              d_head=n_classes, apply_elu=False,
                              ti=ti, tj=tj, cfg=cfg, out_dtype=jnp.float32)
    return out[:n, :n_classes]


# ---------------- pure-JAX reference (for correctness check) ----------------
def _ref_layer(x, w, attn_vec, adj, n_heads, d_head):
    n = x.shape[0]
    g = (x @ w).reshape(n, n_heads, d_head)
    s = g[:, None, :, :] + g[None, :, :, :]
    lrelu = jnp.where(s >= 0, s, 0.2 * s)
    e = jnp.einsum('ijhd,d->ijh', lrelu, attn_vec)
    e = jnp.where(adj[:, :, None] != 0, e, -jnp.inf)
    a = jax.nn.softmax(e, axis=1)
    return jnp.einsum('ijh,jhd->ihd', a, g).mean(axis=1)


def _ref_gat(params, x, adj_mat):
    adj = (adj_mat[..., 0] != 0).astype(jnp.float32)
    h = _ref_layer(x, params["w1"], params["attn1"], adj,
                   params["n_heads"], params["n_hidden"])
    h = jnp.where(h > 0, h, jnp.exp(h) - 1.0)            # ELU
    return _ref_layer(h, params["w2"], params["attn2"], adj, 1, params["n_classes"])


if __name__ == "__main__":
    N, F_IN, N_HIDDEN, N_CLASSES, N_HEADS = 8, 16, 32, 8, 4

    key = jax.random.PRNGKey(0)
    k = jax.random.split(key, 6)
    x = jax.random.normal(k[0], (N, F_IN), jnp.float32)
    params = {
        "n_heads": N_HEADS, "n_hidden": N_HIDDEN, "n_classes": N_CLASSES,
        # layer1: shared linear_l/linear_r (F_in -> n_heads * n_hidden); attn: (n_hidden,)
        "w1": jax.random.normal(k[1], (F_IN, N_HEADS * N_HIDDEN), jnp.float32) * 0.1,
        "attn1": jax.random.normal(k[2], (N_HIDDEN,), jnp.float32) * 0.1,
        # output layer: 1 head (n_hidden -> n_classes); attn: (n_classes,)
        "w2": jax.random.normal(k[3], (N_HIDDEN, N_CLASSES), jnp.float32) * 0.1,
        "attn2": jax.random.normal(k[4], (N_CLASSES,), jnp.float32) * 0.1,
    }
    # random adjacency with self-loops, torch-style shape (N, N, 1)
    adj = (jax.random.uniform(k[5], (N, N)) > 0.5).astype(jnp.float32)
    adj = jnp.maximum(adj, jnp.eye(N, dtype=jnp.float32))[:, :, None]

    out = gat_forward(params, x, adj)
    jax.block_until_ready(out)
    assert out.shape == (N, N_CLASSES)

    ref = _ref_gat(params, x, adj)
    # bf16 MXU operands, bf16 g storage + approx reciprocal => loose tolerance.
    assert jnp.allclose(out, ref, rtol=5e-2, atol=2e-2), "mismatch vs JAX reference"

    print("KERNEL_OK")
</pallas_src>

<mosaic_0001>
module attributes {stable_mosaic.version = 11 : i64} {
  func.func @_proj_kernel(%arg0: i32, %arg1: memref<128x16xf32, #tpu.memory_space<vmem>>, %arg2: memref<16x128xf32, #tpu.memory_space<vmem>>, %arg3: memref<128x128xbf16, #tpu.memory_space<vmem>>) attributes {dimension_semantics = [#tpu.dimension_semantics<parallel>], iteration_bounds = array<i64: 1>, scalar_prefetch = 0 : i64, scratch_operands = 0 : i64, tpu.core_type = #tpu.core_type<tc>, window_params = [{transform_indices = @transform_0, window_bounds = array<i64: 128, 16>}, {pipeline_mode = #tpu.pipeline_mode<synchronous>, transform_indices = @transform_1, window_bounds = array<i64: 16, 128>}, {transform_indices = @transform_2, window_bounds = array<i64: 128, 128>}]} {
    %c0 = arith.constant 0 : index
    %c0_0 = arith.constant 0 : index
    %0 = vector.load %arg1[%c0, %c0_0] : memref<128x16xf32, #tpu.memory_space<vmem>>, vector<128x16xf32>
    %1 = arith.truncf %0 : vector<128x16xf32> to vector<128x16xbf16>
    %c0_1 = arith.constant 0 : index
    %c0_2 = arith.constant 0 : index
    %2 = vector.load %arg2[%c0_1, %c0_2] : memref<16x128xf32, #tpu.memory_space<vmem>>, vector<16x128xf32>
    %3 = arith.truncf %2 : vector<16x128xf32> to vector<16x128xbf16>
    %cst = arith.constant dense<0.000000e+00> : vector<128x128xf32>
    %4 = tpu.matmul %1, %3, %cst {dimension_numbers = #tpu.dot_dimension_numbers<[1], [0], [0], [1], [0, 0, 1, 1], [], []>} : vector<128x16xbf16>, vector<16x128xbf16>, vector<128x128xf32> -> vector<128x128xf32>
    %5 = arith.truncf %4 : vector<128x128xf32> to vector<128x128xbf16>
    %c0_3 = arith.constant 0 : index
    %c0_4 = arith.constant 0 : index
    %6 = vector.load %arg3[%c0_3, %c0_4] : memref<128x128xbf16, #tpu.memory_space<vmem>>, vector<128x128xbf16>
    tpu.vector_store %arg3[%c0_3, %c0_4], %5 {strides = array<i32>} : memref<128x128xbf16, #tpu.memory_space<vmem>>, vector<128x128xbf16>,
    return
  }
  func.func @transform_0(%arg0: i32) -> (i32, i32) {
    %c0_i32 = arith.constant 0 : i32
    %c0_i32_0 = arith.constant 0 : i32
    return %arg0, %c0_i32 : i32, i32
  }
  func.func @transform_1(%arg0: i32) -> (i32, i32) {
    %c0_i32 = arith.constant 0 : i32
    %c0_i32_0 = arith.constant 0 : i32
    %c0_i32_1 = arith.constant 0 : i32
    return %c0_i32, %c0_i32_0 : i32, i32
  }
  func.func @transform_2(%arg0: i32) -> (i32, i32) {
    %c0_i32 = arith.constant 0 : i32
    %c0_i32_0 = arith.constant 0 : i32
    return %arg0, %c0_i32 : i32, i32
  }
}

</mosaic_0001>

<llo_original>
// kernel: tpu_custom_call.1
$region0: #{tpu_custom_call.1}
  #allocation0 [shape = 'u32[]', space=smem, size = 0x4, offset = 0x4, fixed_abs, tag = 'smem constant byte address 0x4 - core index']
  #allocation1 [shape = 'u32[72,128]{1,0:T(1,128)}', space=vmem, size = 0x9000, scoped, tag = 'internal scratch']
  %s0 = inlined_call_operand.vmem [shape: f32[128,16], index: 0, kind: input, shape index: {}]
  %s1 = inlined_call_operand.vmem [shape: f32[16,128], index: 1, kind: input, shape index: {}]
  %s2 = inlined_call_operand.hbm [shape: bf16[128,128], index: 2, kind: output, shape index: {}]
  %s3 = sld [smem:[#allocation0]]
  $region18: #{tpu_custom_call.1} parent=0
    _
  %s5 = ssub.s32 1, %s3
  %s6 = scalar_select 0, %s5, %s3
  $region1: #{tpu_custom_call.1} parent=0
    #allocation2 [shape = 'u8[32768]{0}', space=vmem, size = 0x8000, scoped, tag = 'output window, operand 0, single buffered']
    #allocation3 [shape = 's32[1]{0}', space=sflag, size = 0x4, scoped, tag = 'scoped memory for tpu_custom_call.1']
    %7 = vsyncpa [#allocation3], 0
    // Predicated region
    $region2: #{tpu_custom_call.1} parent=1 // pred_check
      _
    $region3: #{tpu_custom_call.1} parent=1 // pred_check_branch
      %9 = sbr.rel (0) target = $region5
    $region4: #{tpu_custom_call.1} parent=1 // pred_region
      _
    $region5: #{tpu_custom_call.1} parent=1 // pred_fallthru
      _
    // Predicated region
    $region6: #{tpu_custom_call.1} parent=1 // pred_check
      _
    $region7: #{tpu_custom_call.1} parent=1 // pred_check_branch
      %11 = sbr.rel (0) target = $region9
    $region8: #{tpu_custom_call.1} parent=1 // pred_region
      _
    $region9: #{tpu_custom_call.1} parent=1 // pred_fallthru
      _
    %v13 = vld [vmem:[%s0] sm:$0xff]
    %v14 = vld [vmem:[%s0 + $0x8] sm:$0xff]
    %v15 = vld [vmem:[%s0 + $0x10] sm:$0xff]
    %v16 = vld [vmem:[%s0 + $0x18] sm:$0xff]
    %v17 = vld [vmem:[%s0 + $0x20] sm:$0xff]
    %v18 = vld [vmem:[%s0 + $0x28] sm:$0xff]
    %v19 = vld [vmem:[%s0 + $0x30] sm:$0xff]
    %v20 = vld [vmem:[%s0 + $0x38] sm:$0xff]
    %v21 = vld [vmem:[%s0 + $0x40] sm:$0xff]
    %v22 = vld [vmem:[%s0 + $0x48] sm:$0xff]
    %v23 = vld [vmem:[%s0 + $0x50] sm:$0xff]
    %v24 = vld [vmem:[%s0 + $0x58] sm:$0xff]
    %v25 = vld [vmem:[%s0 + $0x60] sm:$0xff]
    %v26 = vld [vmem:[%s0 + $0x68] sm:$0xff]
    %v27 = vld [vmem:[%s0 + $0x70] sm:$0xff]
    %v28 = vld [vmem:[%s0 + $0x78] sm:$0xff]
    %v29 = vpack.c.bf16 %v14, %v13
    %v30 = vpack.c.bf16 %v16, %v15
    %v31 = vpack.c.bf16 %v18, %v17
    %v32 = vpack.c.bf16 %v20, %v19
    %v33 = vpack.c.bf16 %v22, %v21
    %v34 = vpack.c.bf16 %v24, %v23
    %v35 = vpack.c.bf16 %v26, %v25
    %v36 = vpack.c.bf16 %v28, %v27
    %v37 = vld [vmem:[%s1] sm:$0xff]
    %v38 = vld [vmem:[%s1 + $0x8] sm:$0xff]
    %v39 = vpack.c.bf16 %v38, %v37
    %vm40 = vcmask 130048
    %v42 = vsel %vm40, %v29, 0
    %v45 = vsel %vm40, %v30, 0
    %v48 = vsel %vm40, %v31, 0
    %v51 = vsel %vm40, %v32, 0
    %v54 = vsel %vm40, %v33, 0
    %v57 = vsel %vm40, %v34, 0
    %v60 = vsel %vm40, %v35, 0
    %v63 = vsel %vm40, %v36, 0
    %65 = vmatpush.bf16.msra.mxu0 0
    %66 = vmatpush.bf16.msra.mxu0 0
    %67 = vmatpush.bf16.msra.mxu0 0
    %68 = vmatpush.bf16.msra.mxu0 0
    %69 = vmatpush.bf16.msra.mxu0 0
    %70 = vmatpush.bf16.msra.mxu0 0
    %71 = vmatpush.bf16.msra.mxu0 0
    %72 = vmatpush.bf16.msra.mxu0 %v39
    %73 = vmatmul.bf16.gmra.mxu0 %v42
    %v74 = vpop.f32.mrf.mxu0
    %v75 = vadd.f32 0.0, %v74
    %v76 = vpop.f32.mrf.mxu0
    %v77 = vadd.f32 0.0, %v76
    %78 = vmatmul.bf16.gmra.mxu0 %v45
    %v79 = vpop.f32.mrf.mxu0
    %v80 = vadd.f32 0.0, %v79
    %v81 = vpop.f32.mrf.mxu0
    %v82 = vadd.f32 0.0, %v81
    %83 = vmatmul.bf16.gmra.mxu0 %v48
    %v84 = vpop.f32.mrf.mxu0
    %v85 = vadd.f32 0.0, %v84
    %v86 = vpop.f32.mrf.mxu0
    %v87 = vadd.f32 0.0, %v86
    %88 = vmatmul.bf16.gmra.mxu0 %v51
    %v89 = vpop.f32.mrf.mxu0
    %v90 = vadd.f32 0.0, %v89
    %v91 = vpop.f32.mrf.mxu0
    %v92 = vadd.f32 0.0, %v91
    %93 = vmatmul.bf16.gmra.mxu0 %v54
    %v94 = vpop.f32.mrf.mxu0
    %v95 = vadd.f32 0.0, %v94
    %v96 = vpop.f32.mrf.mxu0
    %v97 = vadd.f32 0.0, %v96
    %98 = vmatmul.bf16.gmra.mxu0 %v57
    %v99 = vpop.f32.mrf.mxu0
    %v100 = vadd.f32 0.0, %v99
    %v101 = vpop.f32.mrf.mxu0
    %v102 = vadd.f32 0.0, %v101
    %103 = vmatmul.bf16.gmra.mxu0 %v60
    %v104 = vpop.f32.mrf.mxu0
    %v105 = vadd.f32 0.0, %v104
    %v106 = vpop.f32.mrf.mxu0
    %v107 = vadd.f32 0.0, %v106
    %108 = vmatmul.bf16.gmra.mxu0 %v63
    %v109 = vpop.f32.mrf.mxu0
    %v110 = vadd.f32 0.0, %v109
    %v111 = vpop.f32.mrf.mxu0
    %v112 = vadd.f32 0.0, %v111
    %113 = vdwg.mxu0
    %v114 = vpack.c.bf16 %v75, %v75
    %v115 = vpack.c.bf16 %v77, %v77
    %v116 = vpack.c.bf16 %v80, %v80
    %v117 = vpack.c.bf16 %v82, %v82
    %v118 = vpack.c.bf16 %v85, %v85
    %v119 = vpack.c.bf16 %v87, %v87
    %v120 = vpack.c.bf16 %v90, %v90
    %v121 = vpack.c.bf16 %v92, %v92
    %v122 = vpack.c.bf16 %v95, %v95
    %v123 = vpack.c.bf16 %v97, %v97
    %v124 = vpack.c.bf16 %v100, %v100
    %v125 = vpack.c.bf16 %v102, %v102
    %v126 = vpack.c.bf16 %v105, %v105
    %v127 = vpack.c.bf16 %v107, %v107
    %v128 = vpack.c.bf16 %v110, %v110
    %v129 = vpack.c.bf16 %v112, %v112
    %130 = vst [vmem:[#allocation2] sm:$0xf] %v114
    %131 = vst [vmem:[#allocation2 + $0x4] sm:$0xf] %v115
    %132 = vst [vmem:[#allocation2 + $0x8] sm:$0xf] %v116
    %133 = vst [vmem:[#allocation2 + $0xc] sm:$0xf] %v117
    %134 = vst [vmem:[#allocation2 + $0x10] sm:$0xf] %v118
    %135 = vst [vmem:[#allocation2 + $0x14] sm:$0xf] %v119
    %136 = vst [vmem:[#allocation2 + $0x18] sm:$0xf] %v120
    %137 = vst [vmem:[#allocation2 + $0x1c] sm:$0xf] %v121
    %138 = vst [vmem:[#allocation2 + $0x20] sm:$0xf] %v122
    %139 = vst [vmem:[#allocation2 + $0x24] sm:$0xf] %v123
    %140 = vst [vmem:[#allocation2 + $0x28] sm:$0xf] %v124
    %141 = vst [vmem:[#allocation2 + $0x2c] sm:$0xf] %v125
    %142 = vst [vmem:[#allocation2 + $0x30] sm:$0xf] %v126
    %143 = vst [vmem:[#allocation2 + $0x34] sm:$0xf] %v127
    %144 = vst [vmem:[#allocation2 + $0x38] sm:$0xf] %v128
    %145 = vst [vmem:[#allocation2 + $0x3c] sm:$0xf] %v129
    // Predicated region
    $region10: #{tpu_custom_call.1} parent=1 // pred_check
      _
    $region11: #{tpu_custom_call.1} parent=1 // pred_check_branch
      %147 = sbr.rel (0) target = $region13
    $region12: #{tpu_custom_call.1} parent=1 // pred_region
      %149 = vsyncadd [#allocation3], 0
      %s150 = sshll.u32 [#allocation2], 4
      %s151 = int_to_ptr.vmem [resolvable:$true] %s150
      %s152 = sshll.u32 %s2, 4
      %s153 = int_to_ptr.hbm [resolvable:$true] %s152
      %158 = dma.vmem_to_hbm [thread:$0]  %s151, 1024, %s153, [#allocation3], 64, 64, 4
    $region13: #{tpu_custom_call.1} parent=1 // pred_fallthru
      _
    // Predicated region
    $region14: #{tpu_custom_call.1} parent=1 // pred_check
      _
    $region15: #{tpu_custom_call.1} parent=1 // pred_check_branch
      %160 = sbr.rel (0) target = $region17
    $region16: #{tpu_custom_call.1} parent=1 // pred_region
      %162 = dma.done [#allocation3], 1024
    $region17: #{tpu_custom_call.1} parent=1 // pred_fallthru
      _
    %163 = vsyncpa [#allocation3], 1

</llo_original>
